<compile_context>
chip_gen: v7x
topology: tpu7x:2x2x1
jax: 0.10.0
libtpu: 0.0.40
codegen_flags: <defaults>
</compile_context>

<pallas_src>
import functools

import jax
import jax.numpy as jnp
from jax import lax
from jax.experimental import pallas as pl
from jax.experimental.pallas import tpu as pltpu

_LANES = 128
_ACC_W = 512          # narrow f32 accumulator width (lanes); multiple of 128
_FOLD_UNROLL = 8      # fori_loop unroll for the chunked accumulation


def _round_up(a, b):
    return (a + b - 1) // b * b


def _chip_params():
    """Generation-aware budgets: per-input block bytes, scoped-VMEM cap, #cores."""
    kind = ""
    try:
        kind = jax.devices()[0].device_kind.lower()
    except Exception:
        pass
    if "v7" in kind:
        # 64 MiB physical VMEM / TC, 2 TensorCores per chip, ~3.2 TB/s HBM.
        return dict(block_budget=4 << 20, vmem_cap=48 << 20, cores=2)
    if any(v in kind for v in ("v2", "v3", "v4", "v5", "v6")):
        # 128 MiB VMEM, one Pallas-visible core; HBM-bound => big tiles.
        return dict(block_budget=8 << 20, vmem_cap=100 << 20, cores=1)
    # Unknown platform: conservative settings that are safe everywhere.
    return dict(block_budget=4 << 20, vmem_cap=48 << 20, cores=1)


def _dice_sums_kernel(x_ref, t_ref, int_ref, den_ref, acc_i_ref, acc_d_ref, *,
                      ignore_index, hw, tm, acc_w, n_fold, tiles_per_split,
                      need_mask):
    s = pl.program_id(1)          # core-split index (size 1 unless v7x N==1 split)
    i = pl.program_id(2)          # pixel-tile index within this split (reduction)

    @pl.when(i == 0)
    def _():
        acc_i_ref[...] = jnp.zeros_like(acc_i_ref)
        acc_d_ref[...] = jnp.zeros_like(acc_d_ref)

    tile_g = s * tiles_per_split + i        # global (unclamped) pixel-tile index

    def _chunk(j, masked):
        start = j * acc_w
        if not isinstance(start, int):
            start = pl.multiple_of(start, acc_w)
        sl = pl.ds(start, acc_w)
        t_raw = t_ref[:, sl]
        x = x_ref[:, sl].astype(jnp.float32)
        t = t_raw.astype(jnp.float32)
        if ignore_index is not None:
            # Compare in the *original* dtype (matches the PyTorch reference).
            keep = (t_raw != jnp.asarray(ignore_index, dtype=t_raw.dtype)
                    ).astype(jnp.float32)
            x = x * keep
            t = t * keep
        prod = x * t                         # -> intersect
        ssum = x + t                         # -> denominator
        if masked:
            lane = lax.broadcasted_iota(jnp.int32, prod.shape, 1)
            gidx = tile_g * tm + j * acc_w + lane
            valid = gidx < hw
            prod = jnp.where(valid, prod, 0.0)
            ssum = jnp.where(valid, ssum, 0.0)
        acc_i_ref[...] += prod
        acc_d_ref[...] += ssum

    def _accum_tile(masked):
        if n_fold <= 8:
            for j in range(n_fold):          # short static unroll (LLO visibility)
                _chunk(j, masked)
        else:
            def body(j, carry):
                _chunk(j, masked)
                return carry
            lax.fori_loop(0, n_fold, body, 0, unroll=_FOLD_UNROLL)

    if need_mask:
        first_partial = hw // tm             # tiles below this are fully in-range
        # Only the final (partial / clamped) tiles pay for the iota+compare+select.
        @pl.when(tile_g < first_partial)
        def _():
            _accum_tile(False)

        @pl.when(tile_g >= first_partial)
        def _():
            _accum_tile(True)
    else:
        _accum_tile(False)

    # cross-lane reduce and the (tiny) output store happen once per (n, split)
    @pl.when(i == pl.num_programs(2) - 1)
    def _():
        int_ref[...] = jnp.broadcast_to(
            jnp.sum(acc_i_ref[...], axis=-1, keepdims=True), int_ref.shape)
        den_ref[...] = jnp.broadcast_to(
            jnp.sum(acc_d_ref[...], axis=-1, keepdims=True), den_ref.shape)


def dice_loss(x, target, *, epsilon=1e-5, weight=None, ignore_index=None, tm=None):
    """x, target: (N, C, *spatial) with identical shapes (PyTorch NCHW / NCDHW)."""
    assert x.shape == target.shape, "'input' and 'target' must have the same shape"
    N, C = x.shape[0], x.shape[1]
    hw = 1
    for d in x.shape[2:]:
        hw *= d

    # Free metadata reshape of the native layout: (N, C, H*W); no transpose/cast/pad.
    x3 = jnp.reshape(x, (N, C, hw))
    t3 = jnp.reshape(target, (N, C, hw))

    chip = _chip_params()

    isx = jnp.dtype(x.dtype).itemsize
    ist = jnp.dtype(target.dtype).itemsize
    # Sublane-padded channel counts = what actually lands in VMEM for each dtype.
    cpad_x = _round_up(C, max(1, 32 // isx))
    cpad_t = _round_up(C, max(1, 32 // ist))
    cpad_f32 = _round_up(C, 8)

    if tm is None:
        # Purely byte-based pixel-tile size (no lane cap): ~block_budget of padded
        # VMEM per input block, a multiple of 512 lanes, floor 512.
        row_bytes = max(cpad_x * isx, cpad_t * ist)
        tm = chip["block_budget"] // max(1, row_bytes)
        tm = max(512, (tm // 512) * 512)
        # TODO(synk): for very large C (row_bytes >~ 16 KiB) tile the channel axis
        # with an extra grid dim instead of shrinking tm, to keep DMA rows contiguous.
        # TODO(synk): for C < sublane tile, a (N, C, hw//128, 128) layout would avoid
        # the sublane padding entirely; padding is accounted for in `needed` below.
    if hw <= tm:
        tm_eff = hw                          # single full-width pixel block
        tiles_total = 1
        ragged = False
    else:
        tm_eff = tm
        tiles_total = pl.cdiv(hw, tm_eff)
        ragged = (hw % tm_eff) != 0

    # Narrow folded accumulator: (C, 512) when the tile is a multiple of 512 lanes.
    if tm_eff % _ACC_W == 0:
        acc_w, n_fold = _ACC_W, tm_eff // _ACC_W
    else:
        acc_w, n_fold = tm_eff, 1            # only happens for small single tiles

    # v7x: with N == 1 only one TensorCore gets work from the batch axis, so split
    # the reduction range across a second "parallel" grid axis.
    if chip["cores"] >= 2 and N == 1 and tiles_total >= 2:
        n_split = chip["cores"]
    else:
        n_split = 1
    tiles_per_split = pl.cdiv(tiles_total, n_split)
    clamped = (n_split * tiles_per_split != tiles_total)
    need_mask = bool(ragged or clamped)

    def in_map(n, s, i):
        t = s * tiles_per_split + i
        if clamped:
            # Keep the DMA in-bounds; the kernel masks the duplicate tile to zero.
            t = jnp.minimum(t, tiles_total - 1)
        return (n, 0, t)

    kernel = functools.partial(
        _dice_sums_kernel,
        ignore_index=ignore_index, hw=hw, tm=tm_eff, acc_w=acc_w, n_fold=n_fold,
        tiles_per_split=tiles_per_split, need_mask=need_mask)

    # VMEM footprint (sublane-padded): 2 inputs x 2 buffers + 2 narrow f32
    # accumulators + 2 lane-dense outputs (double-buffered) + headroom.
    needed = (2 * tm_eff * (cpad_x * isx + cpad_t * ist)
              + 2 * cpad_f32 * acc_w * 4
              + 2 * 2 * cpad_f32 * _LANES * 4
              + (2 << 20))
    vmem_limit = int(min(max(needed, 24 << 20), chip["vmem_cap"]))

    int_out, den_out = pl.pallas_call(
        kernel,
        out_shape=(
            jax.ShapeDtypeStruct((N, n_split, C, _LANES), jnp.float32),
            jax.ShapeDtypeStruct((N, n_split, C, _LANES), jnp.float32),
        ),
        grid_spec=pltpu.PrefetchScalarGridSpec(
            num_scalar_prefetch=0,
            grid=(N, n_split, tiles_per_split),
            in_specs=[
                pl.BlockSpec((None, C, tm_eff), in_map),
                pl.BlockSpec((None, C, tm_eff), in_map),
            ],
            out_specs=[
                pl.BlockSpec((None, None, C, _LANES), lambda n, s, i: (n, s, 0, 0)),
                pl.BlockSpec((None, None, C, _LANES), lambda n, s, i: (n, s, 0, 0)),
            ],
            scratch_shapes=[
                pltpu.VMEM((C, acc_w), jnp.float32),
                pltpu.VMEM((C, acc_w), jnp.float32),
            ],
        ),
        compiler_params=pltpu.CompilerParams(
            dimension_semantics=("parallel", "parallel", "arbitrary"),
            vmem_limit_bytes=vmem_limit,
        ),
    )(x3, t3)

    intersect = jnp.sum(int_out[..., 0], axis=(0, 1))      # (C,)
    denominator = jnp.sum(den_out[..., 0], axis=(0, 1))    # (C,)

    if weight is not None:
        intersect = jnp.asarray(weight, jnp.float32) * intersect

    per_channel_dice = 2.0 * intersect / jnp.maximum(denominator,
                                                     jnp.float32(epsilon))
    return jnp.mean(1.0 - per_channel_dice)


def _reference(x, target, epsilon=1e-5, weight=None, ignore_index=None):
    """Pure-JAX mirror of the PyTorch DiceLoss.forward."""
    xf = x.astype(jnp.float32)
    tf = target.astype(jnp.float32)
    if ignore_index is not None:
        mask = (target != ignore_index).astype(jnp.float32)
        xf = xf * mask
        tf = tf * mask
    C = xf.shape[1]
    xflat = jnp.moveaxis(xf, 1, 0).reshape(C, -1)
    tflat = jnp.moveaxis(tf, 1, 0).reshape(C, -1)
    intersect = jnp.sum(xflat * tflat, axis=-1)
    if weight is not None:
        intersect = jnp.asarray(weight, jnp.float32) * intersect
    denominator = jnp.sum(xflat + tflat, axis=-1)
    dice = 2.0 * intersect / jnp.maximum(denominator, jnp.float32(epsilon))
    return jnp.mean(1.0 - dice)


if __name__ == "__main__":
    key = jax.random.PRNGKey(0)
    kx, kt = jax.random.split(key)

    # 1) default config (epsilon=1e-5, weight=None, ignore_index=None), NCHW
    N, C, H, W = 2, 4, 16, 16
    logits = jax.random.normal(kx, (N, C, H, W), dtype=jnp.float32)
    probs = jax.nn.sigmoid(logits)          # DiceLoss is typically fed probabilities
    labels = jax.random.randint(kt, (N, H, W), 0, C, dtype=jnp.int32)
    target = jnp.transpose(jax.nn.one_hot(labels, C, dtype=jnp.float32), (0, 3, 1, 2))

    loss = jax.block_until_ready(dice_loss(probs, target))
    ref = _reference(probs, target)
    assert jnp.isfinite(loss), "non-finite loss"
    assert jnp.allclose(loss, ref, rtol=1e-4, atol=1e-5), (loss, ref)

    # 2) per-class weight + ignore_index paths
    w = jnp.array([1.0, 2.0, 0.5, 1.5], dtype=jnp.float32)
    target_ign = target.at[:, :, :4, :4].set(-1.0)
    loss2 = jax.block_until_ready(
        dice_loss(probs, target_ign, weight=w, ignore_index=-1))
    ref2 = _reference(probs, target_ign, weight=w, ignore_index=-1)
    assert jnp.allclose(loss2, ref2, rtol=1e-4, atol=1e-5), (loss2, ref2)

    # 3) NCDHW volume with a ragged pixel tiling (masked path; on v7x also the
    #    N == 1 core-split axis)
    k3, k4 = jax.random.split(kx)
    x3d = jax.nn.sigmoid(jax.random.normal(k3, (1, 3, 3, 7, 19), dtype=jnp.float32))
    t3d = (jax.random.uniform(k4, (1, 3, 3, 7, 19)) > 0.5).astype(jnp.float32)
    loss3 = jax.block_until_ready(dice_loss(x3d, t3d, tm=128))
    ref3 = _reference(x3d, t3d)
    assert jnp.allclose(loss3, ref3, rtol=1e-4, atol=1e-5), (loss3, ref3)

    # 4) multi-chunk folded accumulator (tm multiple of 512) + ragged last tile
    k5, k6 = jax.random.split(kt)
    x2 = jax.nn.sigmoid(jax.random.normal(k5, (2, 4, 40, 50), dtype=jnp.float32))
    t2 = (jax.random.uniform(k6, (2, 4, 40, 50)) > 0.5).astype(jnp.float32)
    loss4 = jax.block_until_ready(dice_loss(x2, t2, tm=1024))
    ref4 = _reference(x2, t2)
    assert jnp.allclose(loss4, ref4, rtol=1e-4, atol=1e-5), (loss4, ref4)

    print("KERNEL_OK")
</pallas_src>

<mosaic_0001>
module attributes {stable_mosaic.version = 11 : i64} {
  func.func @_dice_sums_kernel(%arg0: i32, %arg1: i32, %arg2: i32, %arg3: memref<1x4x256xf32, #tpu.memory_space<vmem>>, %arg4: memref<1x4x256xf32, #tpu.memory_space<vmem>>, %arg5: memref<1x1x4x128xf32, #tpu.memory_space<vmem>>, %arg6: memref<1x1x4x128xf32, #tpu.memory_space<vmem>>, %arg7: memref<4x256xf32, #tpu.memory_space<vmem>>, %arg8: memref<4x256xf32, #tpu.memory_space<vmem>>) attributes {dimension_semantics = [#tpu.dimension_semantics<parallel>, #tpu.dimension_semantics<parallel>, #tpu.dimension_semantics<arbitrary>], iteration_bounds = array<i64: 2, 1, 1>, scalar_prefetch = 0 : i64, scratch_operands = 2 : i64, tpu.core_type = #tpu.core_type<tc>, window_params = [{transform_indices = @transform_0, window_bounds = array<i64: 1, 4, 256>}, {transform_indices = @transform_1, window_bounds = array<i64: 1, 4, 256>}, {transform_indices = @transform_2, window_bounds = array<i64: 1, 1, 4, 128>}, {transform_indices = @transform_3, window_bounds = array<i64: 1, 1, 4, 128>}]} {
    %c0_i32 = arith.constant 0 : i32
    %0 = arith.cmpi eq, %arg2, %c0_i32 : i32
    %1 = arith.extui %0 : i1 to i32
    %c0_i32_0 = arith.constant 0 : i32
    %2 = arith.cmpi ne, %1, %c0_i32_0 : i32
    scf.if %2 {
      %cst = arith.constant 0.000000e+00 : f32
      %18 = vector.broadcast %cst : f32 to vector<4x256xf32>
      %c0_16 = arith.constant 0 : index
      %c0_17 = arith.constant 0 : index
      %19 = vector.load %arg7[%c0_16, %c0_17] : memref<4x256xf32, #tpu.memory_space<vmem>>, vector<4x256xf32>
      tpu.vector_store %arg7[%c0_16, %c0_17], %18 {strides = array<i32>} : memref<4x256xf32, #tpu.memory_space<vmem>>, vector<4x256xf32>,
      %cst_18 = arith.constant 0.000000e+00 : f32
      %20 = vector.broadcast %cst_18 : f32 to vector<4x256xf32>
      %c0_19 = arith.constant 0 : index
      %c0_20 = arith.constant 0 : index
      %21 = vector.load %arg8[%c0_19, %c0_20] : memref<4x256xf32, #tpu.memory_space<vmem>>, vector<4x256xf32>
      tpu.vector_store %arg8[%c0_19, %c0_20], %20 {strides = array<i32>} : memref<4x256xf32, #tpu.memory_space<vmem>>, vector<4x256xf32>,
    } else {
    }
    %c0 = arith.constant 0 : index
    %c0_1 = arith.constant 0 : index
    %c0_2 = arith.constant 0 : index
    %3 = vector.load %arg4[%c0, %c0_1, %c0_2] : memref<1x4x256xf32, #tpu.memory_space<vmem>>, vector<1x4x256xf32>
    %4 = vector.shape_cast %3 : vector<1x4x256xf32> to vector<4x256xf32>
    %c0_3 = arith.constant 0 : index
    %c0_4 = arith.constant 0 : index
    %c0_5 = arith.constant 0 : index
    %5 = vector.load %arg3[%c0_3, %c0_4, %c0_5] : memref<1x4x256xf32, #tpu.memory_space<vmem>>, vector<1x4x256xf32>
    %6 = vector.shape_cast %5 : vector<1x4x256xf32> to vector<4x256xf32>
    %7 = arith.mulf %6, %4 : vector<4x256xf32>
    %8 = arith.addf %6, %4 : vector<4x256xf32>
    %c0_6 = arith.constant 0 : index
    %c0_7 = arith.constant 0 : index
    %9 = vector.load %arg7[%c0_6, %c0_7] : memref<4x256xf32, #tpu.memory_space<vmem>>, vector<4x256xf32>
    %10 = arith.addf %9, %7 : vector<4x256xf32>
    %c0_8 = arith.constant 0 : index
    %c0_9 = arith.constant 0 : index
    %11 = vector.load %arg7[%c0_8, %c0_9] : memref<4x256xf32, #tpu.memory_space<vmem>>, vector<4x256xf32>
    tpu.vector_store %arg7[%c0_8, %c0_9], %10 {strides = array<i32>} : memref<4x256xf32, #tpu.memory_space<vmem>>, vector<4x256xf32>,
    %c0_10 = arith.constant 0 : index
    %c0_11 = arith.constant 0 : index
    %12 = vector.load %arg8[%c0_10, %c0_11] : memref<4x256xf32, #tpu.memory_space<vmem>>, vector<4x256xf32>
    %13 = arith.addf %12, %8 : vector<4x256xf32>
    %c0_12 = arith.constant 0 : index
    %c0_13 = arith.constant 0 : index
    %14 = vector.load %arg8[%c0_12, %c0_13] : memref<4x256xf32, #tpu.memory_space<vmem>>, vector<4x256xf32>
    tpu.vector_store %arg8[%c0_12, %c0_13], %13 {strides = array<i32>} : memref<4x256xf32, #tpu.memory_space<vmem>>, vector<4x256xf32>,
    %c0_i32_14 = arith.constant 0 : i32
    %15 = arith.cmpi eq, %arg2, %c0_i32_14 : i32
    %16 = arith.extui %15 : i1 to i32
    %c0_i32_15 = arith.constant 0 : i32
    %17 = arith.cmpi ne, %16, %c0_i32_15 : i32
    scf.if %17 {
      %c0_16 = arith.constant 0 : index
      %c0_17 = arith.constant 0 : index
      %18 = vector.load %arg7[%c0_16, %c0_17] : memref<4x256xf32, #tpu.memory_space<vmem>>, vector<4x256xf32>
      %cst = arith.constant dense<0.000000e+00> : vector<4xf32>
      %19 = vector.multi_reduction <add>, %18, %cst [1] : vector<4x256xf32> to vector<4xf32>
      %20 = vector.shape_cast %19 : vector<4xf32> to vector<4x1xf32>
      %21 = vector.shape_cast %20 : vector<4x1xf32> to vector<4x1xf32>
      %22 = vector.broadcast %21 : vector<4x1xf32> to vector<4x128xf32>
      %c0_18 = arith.constant 0 : index
      %c0_19 = arith.constant 0 : index
      %c0_20 = arith.constant 0 : index
      %c0_21 = arith.constant 0 : index
      %23 = vector.load %arg5[%c0_18, %c0_19, %c0_20, %c0_21] : memref<1x1x4x128xf32, #tpu.memory_space<vmem>>, vector<1x1x4x128xf32>
      %24 = vector.shape_cast %23 : vector<1x1x4x128xf32> to vector<4x128xf32>
      %25 = vector.shape_cast %22 : vector<4x128xf32> to vector<1x1x4x128xf32>
      tpu.vector_store %arg5[%c0_18, %c0_19, %c0_20, %c0_21], %25 {strides = array<i32>} : memref<1x1x4x128xf32, #tpu.memory_space<vmem>>, vector<1x1x4x128xf32>,
      %c0_22 = arith.constant 0 : index
      %c0_23 = arith.constant 0 : index
      %26 = vector.load %arg8[%c0_22, %c0_23] : memref<4x256xf32, #tpu.memory_space<vmem>>, vector<4x256xf32>
      %cst_24 = arith.constant dense<0.000000e+00> : vector<4xf32>
      %27 = vector.multi_reduction <add>, %26, %cst_24 [1] : vector<4x256xf32> to vector<4xf32>
      %28 = vector.shape_cast %27 : vector<4xf32> to vector<4x1xf32>
      %29 = vector.shape_cast %28 : vector<4x1xf32> to vector<4x1xf32>
      %30 = vector.broadcast %29 : vector<4x1xf32> to vector<4x128xf32>
      %c0_25 = arith.constant 0 : index
      %c0_26 = arith.constant 0 : index
      %c0_27 = arith.constant 0 : index
      %c0_28 = arith.constant 0 : index
      %31 = vector.load %arg6[%c0_25, %c0_26, %c0_27, %c0_28] : memref<1x1x4x128xf32, #tpu.memory_space<vmem>>, vector<1x1x4x128xf32>
      %32 = vector.shape_cast %31 : vector<1x1x4x128xf32> to vector<4x128xf32>
      %33 = vector.shape_cast %30 : vector<4x128xf32> to vector<1x1x4x128xf32>
      tpu.vector_store %arg6[%c0_25, %c0_26, %c0_27, %c0_28], %33 {strides = array<i32>} : memref<1x1x4x128xf32, #tpu.memory_space<vmem>>, vector<1x1x4x128xf32>,
    } else {
    }
    return
  }
  func.func @transform_0(%arg0: i32, %arg1: i32, %arg2: i32) -> (i32, i32, i32) {
    %c1_i32 = arith.constant 1 : i32
    %0 = arith.muli %arg1, %c1_i32 : i32
    %1 = arith.addi %0, %arg2 : i32
    %c0_i32 = arith.constant 0 : i32
    %c0_i32_0 = arith.constant 0 : i32
    return %arg0, %c0_i32, %1 : i32, i32, i32
  }
  func.func @transform_1(%arg0: i32, %arg1: i32, %arg2: i32) -> (i32, i32, i32) {
    %c1_i32 = arith.constant 1 : i32
    %0 = arith.muli %arg1, %c1_i32 : i32
    %1 = arith.addi %0, %arg2 : i32
    %c0_i32 = arith.constant 0 : i32
    %c0_i32_0 = arith.constant 0 : i32
    return %arg0, %c0_i32, %1 : i32, i32, i32
  }
  func.func @transform_2(%arg0: i32, %arg1: i32, %arg2: i32) -> (i32, i32, i32, i32) {
    %c0_i32 = arith.constant 0 : i32
    %c0_i32_0 = arith.constant 0 : i32
    %c0_i32_1 = arith.constant 0 : i32
    return %arg0, %arg1, %c0_i32, %c0_i32_0 : i32, i32, i32, i32
  }
  func.func @transform_3(%arg0: i32, %arg1: i32, %arg2: i32) -> (i32, i32, i32, i32) {
    %c0_i32 = arith.constant 0 : i32
    %c0_i32_0 = arith.constant 0 : i32
    %c0_i32_1 = arith.constant 0 : i32
    return %arg0, %arg1, %c0_i32, %c0_i32_0 : i32, i32, i32, i32
  }
}

</mosaic_0001>

<llo_original>
// kernel: tpu_custom_call.1
$region0: #{tpu_custom_call.1}
  #allocation0 [shape = 'u32[]', space=smem, size = 0x4, offset = 0x4, fixed_abs, tag = 'smem constant byte address 0x4 - core index']
  #allocation1 [shape = 'u32[144,128]{1,0:T(1,128)}', space=vmem, size = 0x12000, scoped, tag = 'internal scratch']
  #allocation2 [shape = 'f32[4,256]{1,0:T(4,128)}', space=vmem, size = 0x1000, scoped, tag = 'scratch operand']
  #allocation3 [shape = 'f32[4,256]{1,0:T(4,128)}', space=vmem, size = 0x1000, scoped, tag = 'scratch operand']
  %s0 = inlined_call_operand.hbm [shape: f32[2,4,256], index: 0, kind: input, shape index: {}]
  %s1 = inlined_call_operand.hbm [shape: f32[2,4,256], index: 1, kind: input, shape index: {}]
  %s2 = inlined_call_operand.hbm [shape: f32[2,1,4,128], index: 2, kind: output, shape index: {0}]
  %s3 = inlined_call_operand.hbm [shape: f32[2,1,4,128], index: 3, kind: output, shape index: {1}]
  %4 = xla_tuple %s2, %s3
  %s5 = sld [smem:[#allocation0]]
  $region65: #{tpu_custom_call.1} parent=0
    _
  %s7 = ssub.s32 1, %s5
  %s8 = scalar_select 0, %s7, %s5
  $region1: #{tpu_custom_call.1} parent=0
    #allocation4 [shape = 'u8[8192]{0}', space=vmem, size = 0x2000, scoped, tag = 'input window, operand 0']
    #allocation5 [shape = 's32[2]{0}', space=sflag, size = 0x8, scoped, tag = 'scoped memory for tpu_custom_call.1']
    #allocation6 [shape = 's32[2]{0}', space=sflag, size = 0x8, scoped, tag = 'scoped memory for tpu_custom_call.1']
    #allocation7 [shape = 'u8[8192]{0}', space=vmem, size = 0x2000, scoped, tag = 'input window, operand 1']
    #allocation8 [shape = 's32[2]{0}', space=sflag, size = 0x8, scoped, tag = 'scoped memory for tpu_custom_call.1']
    #allocation9 [shape = 'u8[4096]{0}', space=vmem, size = 0x1000, scoped, tag = 'output window, operand 0']
    #allocation10 [shape = 'u8[4096]{0}', space=vmem, size = 0x1000, scoped, tag = 'output window, operand 1']
    #allocation11 [shape = 's32[2]{0}', space=sflag, size = 0x8, scoped, tag = 'scoped memory for tpu_custom_call.1']
    %9 = vsyncpa [#allocation5], 0
    %s10 = scalar_lea.sflag [#allocation5], 1
    %11 = vsyncpa %s10, 0
    %12 = vsyncpa [#allocation8], 0
    %s13 = scalar_lea.sflag [#allocation8], 1
    %14 = vsyncpa %s13, 0
    %15 = vsyncpa [#allocation6], 0
    %s16 = scalar_lea.sflag [#allocation6], 1
    %17 = vsyncpa %s16, 0
    %18 = vsyncpa [#allocation11], 0
    %s19 = scalar_lea.sflag [#allocation11], 1
    %20 = vsyncpa %s19, 0
    loop: start=0, step=1, limit=4
    $region2: #{tpu_custom_call.1} parent=1 // loop_pre_header
      _
    $region3: #{tpu_custom_call.1} parent=1 // loop_header
      %s22 = sphi 0, %s26
      %p23 = scmp.ge.s32.totalorder %s22, 4
      %s29 = sphi 0, %s48
      %s30 = sphi 0, %s44
      %s31 = sphi 0, %s40
      %s32 = sphi 0, %s29
      %s33 = sphi 0, %s30
      %s34 = sphi 0, %s31
      %s35 = sphi 0, %s32
      %s36 = sphi 0, %s33
      %s37 = sphi 0, %s34
      %s55 = sphi 0, %s57
      %s58 = sphi 0, %s55
      %s59 = sphi 0, %s58
      %s75 = sphi 0, %s59
      %s85 = sphi 0, %s87
      %s88 = sphi 0, %s85
      %s89 = sphi 0, %s88
      %s105 = sphi 0, %s89
      %s113 = sphi 0, %s115
      %s116 = sphi 0, %s113
      %s117 = sphi 0, %s116
      %s133 = sphi 0, %s117
      %s141 = sphi 0, %s143
      %s144 = sphi 0, %s141
      %s145 = sphi 0, %s144
      %s161 = sphi 0, %s145
    $region4: #{tpu_custom_call.1} parent=1 // loop_header_branch
      %25 = sbr.rel (%p23) target = $region8
    $region5: #{tpu_custom_call.1} parent=1 // loop_body
      %s27 = ssub.s32 %s22, 1
      %s28 = ssub.s32 %s22, 2
      %s38 = sadd.s32 1, %s31
      %p39 = scmp.ge.s32.totalorder %s38, 1
      %s40 = scalar_select %p39, 0, %s38
      %s41 = sadd.s32 1, %s30
      %s42 = scalar_select %p39, %s41, %s30
      %p43 = scmp.ge.s32.totalorder %s42, 1
      %s44 = scalar_select %p43, 0, %s42
      %s45 = sadd.s32 1, %s29
      %s46 = scalar_select %p43, %s45, %s29
      %p47 = scmp.ge.s32.totalorder %s46, 2
      %s48 = scalar_select %p47, 0, %s46
      %s49 = sadd.s32 %s30, %s31
      %s50 = sadd.s32 %s44, %s40
      %s51 = ssub.s32 %s29, %s48
      %s52 = ssub.s32 %s49, %s50
      %s53 = sor.u32 %s51, %s52
      %p54 = scmp.eq.s32.totalorder %s53, 0
      %s56 = sadd.s32 %s55, 1
      %s57 = scalar_select %p54, %s55, %s56
      %p60 = pneg %p54
      %p61 = scmp.eq.s32.totalorder %s22, 1
      %p62 = por %p60, %p61
      %p63 = scmp.ne.s32.totalorder %s55, %s58
      %p64 = scmp.eq.s32.totalorder %s22, 0
      %p65 = por %p63, %p64
      %p66 = scmp.ne.s32.totalorder %s55, %s58
      %p67 = scmp.eq.s32.totalorder %s27, 1
      %p68 = por %p66, %p67
      %p69 = scmp.ne.s32.totalorder %s58, %s59
      %p70 = scmp.eq.s32.totalorder %s27, 0
      %p71 = por %p69, %p70
      %p72 = scmp.ne.s32.totalorder %s58, %s59
      %p73 = scmp.eq.s32.totalorder %s28, 1
      %p74 = por %p72, %p73
      %p76 = scmp.ne.s32.totalorder %s59, %s75
      %p77 = scmp.eq.s32.totalorder %s28, 0
      %p78 = por %p76, %p77
      %s79 = sadd.s32 %s30, %s31
      %s80 = sadd.s32 %s44, %s40
      %s81 = ssub.s32 %s29, %s48
      %s82 = ssub.s32 %s79, %s80
      %s83 = sor.u32 %s81, %s82
      %p84 = scmp.eq.s32.totalorder %s83, 0
      %s86 = sadd.s32 %s85, 1
      %s87 = scalar_select %p84, %s85, %s86
      %p90 = pneg %p84
      %p91 = scmp.eq.s32.totalorder %s22, 1
      %p92 = por %p90, %p91
      %p93 = scmp.ne.s32.totalorder %s85, %s88
      %p94 = scmp.eq.s32.totalorder %s22, 0
      %p95 = por %p93, %p94
      %p96 = scmp.ne.s32.totalorder %s85, %s88
      %p97 = scmp.eq.s32.totalorder %s27, 1
      %p98 = por %p96, %p97
      %p99 = scmp.ne.s32.totalorder %s88, %s89
      %p100 = scmp.eq.s32.totalorder %s27, 0
      %p101 = por %p99, %p100
      %p102 = scmp.ne.s32.totalorder %s88, %s89
      %p103 = scmp.eq.s32.totalorder %s28, 1
      %p104 = por %p102, %p103
      %p106 = scmp.ne.s32.totalorder %s89, %s105
      %p107 = scmp.eq.s32.totalorder %s28, 0
      %p108 = por %p106, %p107
      %s109 = ssub.s32 %s29, %s48
      %s110 = ssub.s32 %s30, %s44
      %s111 = sor.u32 %s109, %s110
      %p112 = scmp.eq.s32.totalorder %s111, 0
      %s114 = sadd.s32 %s113, 1
      %s115 = scalar_select %p112, %s113, %s114
      %p118 = pneg %p112
      %p119 = scmp.eq.s32.totalorder %s22, 1
      %p120 = por %p118, %p119
      %p121 = scmp.ne.s32.totalorder %s113, %s116
      %p122 = scmp.eq.s32.totalorder %s22, 0
      %p123 = por %p121, %p122
      %p124 = scmp.ne.s32.totalorder %s113, %s116
      %p125 = scmp.eq.s32.totalorder %s27, 1
      %p126 = por %p124, %p125
      %p127 = scmp.ne.s32.totalorder %s116, %s117
      %p128 = scmp.eq.s32.totalorder %s27, 0
      %p129 = por %p127, %p128
      %p130 = scmp.ne.s32.totalorder %s116, %s117
      %p131 = scmp.eq.s32.totalorder %s28, 1
      %p132 = por %p130, %p131
      %p134 = scmp.ne.s32.totalorder %s117, %s133
      %p135 = scmp.eq.s32.totalorder %s28, 0
      %p136 = por %p134, %p135
      %s137 = ssub.s32 %s29, %s48
      %s138 = ssub.s32 %s30, %s44
      %s139 = sor.u32 %s137, %s138
      %p140 = scmp.eq.s32.totalorder %s139, 0
      %s142 = sadd.s32 %s141, 1
      %s143 = scalar_select %p140, %s141, %s142
      %p146 = pneg %p140
      %p147 = scmp.eq.s32.totalorder %s22, 1
      %p148 = por %p146, %p147
      %p149 = scmp.ne.s32.totalorder %s141, %s144
      %p150 = scmp.eq.s32.totalorder %s22, 0
      %p151 = por %p149, %p150
      %p152 = scmp.ne.s32.totalorder %s141, %s144
      %p153 = scmp.eq.s32.totalorder %s27, 1
      %p154 = por %p152, %p153
      %p155 = scmp.ne.s32.totalorder %s144, %s145
      %p156 = scmp.eq.s32.totalorder %s27, 0
      %p157 = por %p155, %p156
      %p158 = scmp.ne.s32.totalorder %s144, %s145
      %p159 = scmp.eq.s32.totalorder %s28, 1
      %p160 = por %p158, %p159
      %p162 = scmp.ne.s32.totalorder %s145, %s161
      %p163 = scmp.eq.s32.totalorder %s28, 0
      %p164 = por %p162, %p163
      %p165 = scmp.le.s32.totalorder 1, %s22
      %p166 = scmp.lt.s32.totalorder %s22, 3
      %p167 = pnand %p165, %p166
      %p168 = pneg %p167
      // Predicated region
      $region9: #{tpu_custom_call.1} parent=5 // pred_check
        _
      $region10: #{tpu_custom_call.1} parent=5 // pred_check_branch
        %170 = sbr.rel (%p167) target = $region12
      $region11: #{tpu_custom_call.1} parent=5 // pred_region
        %s171 = ssub.s32 %s22, 1
      $region12: #{tpu_custom_call.1} parent=5 // pred_fallthru
        _
      %p172 = scmp.lt.s32.totalorder %s22, 2
      // Predicated region
      $region13: #{tpu_custom_call.1} parent=5 // pred_check
        %p173 = pneg %p172
      $region14: #{tpu_custom_call.1} parent=5 // pred_check_branch
        %175 = sbr.rel (%p173) target = $region16
      $region15: #{tpu_custom_call.1} parent=5 // pred_region
        // Predicated region
        $region17: #{tpu_custom_call.1} parent=15 // pred_check
          %p176 = pneg %p65
        $region18: #{tpu_custom_call.1} parent=15 // pred_check_branch
          %178 = sbr.rel (%p176) target = $region20
        $region19: #{tpu_custom_call.1} parent=15 // pred_region
          %s179 = sand.u32 %s55, 1
          %s180 = scalar_lea.sflag [#allocation5], %s179
          %s181 = sand.u32 %s55, 1
          %s182 = smul.addr %s181, 8
          %s183 = scalar_lea.vmem [#allocation4], %s182
          %s184 = sadd.s32 %s30, %s31
          %s185 = smul.u32 2, %s184
          %s187 = ssub.s32 128, 128
          %188 = vsyncadd %s180, %s187
          %s189 = smul.addr %s29, 2
          %s190 = sadd.s32 %s185, %s189
          %s191 = smul.addr %s190, 64
          %s192 = scalar_lea.hbm %s0, %s191
          %s194 = sshll.u32 %s183, 4
          %s195 = int_to_ptr.vmem [resolvable:$true] %s194
          %197 = dma.hbm_to_vmem [thread:$0]  %s192, 128, %s195, %s180
        $region20: #{tpu_custom_call.1} parent=15 // pred_fallthru
          _
        // Predicated region
        $region21: #{tpu_custom_call.1} parent=15 // pred_check
          %p198 = pneg %p95
        $region22: #{tpu_custom_call.1} parent=15 // pred_check_branch
          %200 = sbr.rel (%p198) target = $region24
        $region23: #{tpu_custom_call.1} parent=15 // pred_region
          %s201 = sand.u32 %s85, 1
          %s202 = scalar_lea.sflag [#allocation8], %s201
          %s203 = sand.u32 %s85, 1
          %s204 = smul.addr %s203, 8
          %s205 = scalar_lea.vmem [#allocation7], %s204
          %s206 = sadd.s32 %s30, %s31
          %s207 = smul.u32 2, %s206
          %s209 = ssub.s32 128, 128
          %210 = vsyncadd %s202, %s209
          %s211 = smul.addr %s29, 2
          %s212 = sadd.s32 %s207, %s211
          %s213 = smul.addr %s212, 64
          %s214 = scalar_lea.hbm %s1, %s213
          %s216 = sshll.u32 %s205, 4
          %s217 = int_to_ptr.vmem [resolvable:$true] %s216
          %219 = dma.hbm_to_vmem [thread:$0]  %s214, 128, %s217, %s202
        $region24: #{tpu_custom_call.1} parent=15 // pred_fallthru
          _
      $region16: #{tpu_custom_call.1} parent=5 // pred_fallthru
        _
      %p220 = scmp.le.s32.totalorder 1, %s22
      %p221 = scmp.lt.s32.totalorder %s22, 3
      %p222 = pnand %p220, %p221
      %p223 = pneg %p222
      // Predicated region
      $region25: #{tpu_custom_call.1} parent=5 // pred_check
        _
      $region26: #{tpu_custom_call.1} parent=5 // pred_check_branch
        %225 = sbr.rel (%p222) target = $region28
      $region27: #{tpu_custom_call.1} parent=5 // pred_region
        %s226 = ssub.s32 %s22, 1
        %s227 = sand.u32 %s58, 1
        %s228 = scalar_lea.sflag [#allocation5], %s227
        %s229 = sand.u32 %s58, 1
        %s230 = smul.addr %s229, 8
        %s231 = scalar_lea.vmem [#allocation4], %s230
        // Predicated region
        $region29: #{tpu_custom_call.1} parent=27 // pred_check
          %p232 = pneg %p71
        $region30: #{tpu_custom_call.1} parent=27 // pred_check_branch
          %234 = sbr.rel (%p232) target = $region32
        $region31: #{tpu_custom_call.1} parent=27 // pred_region
          %235 = dma.done %s228, 128
        $region32: #{tpu_custom_call.1} parent=27 // pred_fallthru
          _
        %s236 = sand.u32 %s88, 1
        %s237 = scalar_lea.sflag [#allocation8], %s236
        %s238 = sand.u32 %s88, 1
        %s239 = smul.addr %s238, 8
        %s240 = scalar_lea.vmem [#allocation7], %s239
        // Predicated region
        $region33: #{tpu_custom_call.1} parent=27 // pred_check
          %p241 = pneg %p101
        $region34: #{tpu_custom_call.1} parent=27 // pred_check_branch
          %243 = sbr.rel (%p241) target = $region36
        $region35: #{tpu_custom_call.1} parent=27 // pred_region
          %244 = dma.done %s237, 128
        $region36: #{tpu_custom_call.1} parent=27 // pred_fallthru
          _
        %s245 = sand.u32 %s58, 1
        %s246 = scalar_lea.sflag [#allocation5], %s245
        %s247 = sand.u32 %s58, 1
        %s248 = smul.addr %s247, 8
        %s249 = scalar_lea.vmem [#allocation4], %s248
        %p250 = pneg %p71
        %p251 = pneg %p68
        %s252 = sand.u32 %s88, 1
        %s253 = scalar_lea.sflag [#allocation8], %s252
        %s254 = sand.u32 %s88, 1
        %s255 = smul.addr %s254, 8
        %s256 = scalar_lea.vmem [#allocation7], %s255
        %p257 = pneg %p101
        %p258 = pneg %p98
        %p259 = pneg %p129
        %p260 = pneg %p126
        %s261 = sand.u32 %s116, 1
        %s262 = scalar_lea.sflag [#allocation6], %s261
        %s263 = sand.u32 %s116, 1
        %s264 = smul.addr %s263, 4
        %s265 = scalar_lea.vmem [#allocation9], %s264
        %p266 = pneg %p157
        %p267 = pneg %p154
        %s268 = sand.u32 %s144, 1
        %s269 = scalar_lea.sflag [#allocation11], %s268
        %s270 = sand.u32 %s144, 1
        %s271 = smul.addr %s270, 4
        %s272 = scalar_lea.vmem [#allocation10], %s271
        %s273 = sadd.s32 %s33, %s34
        %s274 = smul.u32 2, %s273
        %s275 = sadd.s32 %s33, %s34
        %s276 = smul.u32 2, %s275
        %p277 = scmp.eq.s32.totalorder %s34, 0
        // Predicated region
        $region37: #{tpu_custom_call.1} parent=27 // pred_check
          %p278 = pneg %p277
        $region38: #{tpu_custom_call.1} parent=27 // pred_check_branch
          %280 = sbr.rel (%p278) target = $region40
        $region39: #{tpu_custom_call.1} parent=27 // pred_region
          %281 = vst [vmem:[#allocation2] sm:$0xff] 0.0
          %282 = vst [vmem:[#allocation3] sm:$0xff] 0.0
        $region40: #{tpu_custom_call.1} parent=27 // pred_fallthru
          _
        %v283 = vld [vmem:[%s240] sm:$0xff]
        %v284 = vld [vmem:[%s231] sm:$0xff]
        %v285 = vmul.f32 %v284, %v283
        %v286 = vadd.f32 %v284, %v283
        %v287 = vld [vmem:[#allocation2] sm:$0xff]
        %v288 = vadd.f32 %v287, %v285
        %289 = vst [vmem:[#allocation2] sm:$0xff] %v288
        %v290 = vld [vmem:[#allocation3] sm:$0xff]
        %v291 = vadd.f32 %v290, %v286
        %292 = vst [vmem:[#allocation3] sm:$0xff] %v291
        // Predicated region
        $region41: #{tpu_custom_call.1} parent=27 // pred_check
          %p293 = pneg %p277
        $region42: #{tpu_custom_call.1} parent=27 // pred_check_branch
          %295 = sbr.rel (%p293) target = $region44
        $region43: #{tpu_custom_call.1} parent=27 // pred_region
          %v296 = vld [vmem:[#allocation2] sm:$0xff]
          %v298 = vcombine.high %v296, %v296
          %vm300 = vcmask 1043456
          %v301 = vsel %vm300, %v296, 0.0
          %v302 = vsel %vm300, %v298, 0.0
          %v303 = vadd.f32 %v301, %v302
          %304 = vadd.xlane.f32.xlu0 %v303
          %v305 = vpop.xlane.xlu0 %304
          %306 = vst [vmem:[%s265] sm:$0xf] %v305
          %v307 = vld [vmem:[#allocation3] sm:$0xff]
          %v309 = vcombine.high %v307, %v307
          %v311 = vsel %vm300, %v307, 0.0
          %v312 = vsel %vm300, %v309, 0.0
          %v313 = vadd.f32 %v311, %v312
          %314 = vadd.xlane.f32.xlu0 %v313
          %v315 = vpop.xlane.xlu0 %314
          %316 = vst [vmem:[%s272] sm:$0xf] %v315
        $region44: #{tpu_custom_call.1} parent=27 // pred_fallthru
          _
        %s317 = sand.u32 %s116, 1
        %s318 = scalar_lea.sflag [#allocation6], %s317
        %s319 = sand.u32 %s116, 1
        %s320 = smul.addr %s319, 4
        %s321 = scalar_lea.vmem [#allocation9], %s320
        %s322 = sand.u32 %s144, 1
        %s323 = scalar_lea.sflag [#allocation11], %s322
        %s324 = sand.u32 %s144, 1
        %s325 = smul.addr %s324, 4
        %s326 = scalar_lea.vmem [#allocation10], %s325
        // Predicated region
        $region45: #{tpu_custom_call.1} parent=27 // pred_check
          %p327 = pneg %p126
        $region46: #{tpu_custom_call.1} parent=27 // pred_check_branch
          %329 = sbr.rel (%p327) target = $region48
        $region47: #{tpu_custom_call.1} parent=27 // pred_region
          %s331 = ssub.s32 64, 64
          %332 = vsyncadd %s318, %s331
          %s333 = sadd.s32 %s33, %s32
          %s334 = smul.addr %s333, 64
          %s335 = scalar_lea.hbm %s2, %s334
          %s337 = sshll.u32 %s321, 4
          %s338 = int_to_ptr.vmem [resolvable:$true] %s337
          %340 = dma.vmem_to_hbm [thread:$0]  %s338, 64, %s335, %s318
        $region48: #{tpu_custom_call.1} parent=27 // pred_fallthru
          _
        // Predicated region
        $region49: #{tpu_custom_call.1} parent=27 // pred_check
          %p341 = pneg %p154
        $region50: #{tpu_custom_call.1} parent=27 // pred_check_branch
          %343 = sbr.rel (%p341) target = $region52
        $region51: #{tpu_custom_call.1} parent=27 // pred_region
          %s345 = ssub.s32 64, 64
          %346 = vsyncadd %s323, %s345
          %s347 = sadd.s32 %s33, %s32
          %s348 = smul.addr %s347, 64
          %s349 = scalar_lea.hbm %s3, %s348
          %s351 = sshll.u32 %s326, 4
          %s352 = int_to_ptr.vmem [resolvable:$true] %s351
          %354 = dma.vmem_to_hbm [thread:$0]  %s352, 64, %s349, %s323
        $region52: #{tpu_custom_call.1} parent=27 // pred_fallthru
          _
      $region28: #{tpu_custom_call.1} parent=5 // pred_fallthru
        _
      %p355 = scmp.le.s32.totalorder 2, %s22
      // Predicated region
      $region53: #{tpu_custom_call.1} parent=5 // pred_check
        %p356 = pneg %p355
      $region54: #{tpu_custom_call.1} parent=5 // pred_check_branch
        %358 = sbr.rel (%p356) target = $region56
      $region55: #{tpu_custom_call.1} parent=5 // pred_region
        %s359 = ssub.s32 %s22, 2
        // Predicated region
        $region57: #{tpu_custom_call.1} parent=55 // pred_check
          %p360 = pneg %p132
        $region58: #{tpu_custom_call.1} parent=55 // pred_check_branch
          %362 = sbr.rel (%p360) target = $region60
        $region59: #{tpu_custom_call.1} parent=55 // pred_region
          %s363 = sand.u32 %s117, 1
          %s364 = scalar_lea.sflag [#allocation6], %s363
          %s365 = sand.u32 %s117, 1
          %s366 = smul.addr %s365, 4
          %s367 = scalar_lea.vmem [#allocation9], %s366
          %368 = dma.done %s364, 64
        $region60: #{tpu_custom_call.1} parent=55 // pred_fallthru
          _
        // Predicated region
        $region61: #{tpu_custom_call.1} parent=55 // pred_check
          %p369 = pneg %p160
        $region62: #{tpu_custom_call.1} parent=55 // pred_check_branch
          %371 = sbr.rel (%p369) target = $region64
        $region63: #{tpu_custom_call.1} parent=55 // pred_region
          %s372 = sand.u32 %s145, 1
          %s373 = scalar_lea.sflag [#allocation11], %s372
          %s374 = sand.u32 %s145, 1
          %s375 = smul.addr %s374, 4
          %s376 = scalar_lea.vmem [#allocation10], %s375
          %377 = dma.done %s373, 64
        $region64: #{tpu_custom_call.1} parent=55 // pred_fallthru
          _
      $region56: #{tpu_custom_call.1} parent=5 // pred_fallthru
        _
    $region6: #{tpu_custom_call.1} parent=1 // loop_footer
      %s26 = sadd.s32 1, %s22
    $region7: #{tpu_custom_call.1} parent=1 // loop_footer_branch
      %21 = sbr.rel target = $region3
    $region8: #{tpu_custom_call.1} parent=1 // loop_exit
      _
    %378 = vsyncpa [#allocation5], 1
    %s379 = scalar_lea.sflag [#allocation5], 1
    %380 = vsyncpa %s379, 1
    %381 = vsyncpa [#allocation8], 1
    %s382 = scalar_lea.sflag [#allocation8], 1
    %383 = vsyncpa %s382, 1
    %384 = vsyncpa [#allocation6], 1
    %s385 = scalar_lea.sflag [#allocation6], 1
    %386 = vsyncpa %s385, 1
    %387 = vsyncpa [#allocation11], 1
    %s388 = scalar_lea.sflag [#allocation11], 1
    %389 = vsyncpa %s388, 1

</llo_original>
